<compile_context>
chip_gen: v5e
topology: v5e:2x2
jax: 0.10.0
libtpu: 0.0.40
codegen_flags: <defaults>
</compile_context>

<pallas_src>
import jax
import jax.numpy as jnp
from jax.experimental import pallas as pl
from jax.experimental.pallas import tpu as pltpu


# --------------------------- small tiling helpers ---------------------------
def _round_up(x, m):
    return ((x + m - 1) // m) * m


def _row_tile(n, cap=512):
    """Largest divisor of n that is a multiple of 8 and <= cap (n is mult of 8)."""
    for c in range(min(n, cap), 7, -1):
        if n % c == 0 and c % 8 == 0:
            return c
    return min(n, 8)


# ------------------- batched projection kernel (MXU matmul) -----------------
# For each output head d (direction, or the single conv head):
#   out[d] = sum_k  h_k @ W[d, k]  + b[d]
# where k runs over the input chunks (1 for raw features, 2 for the fwd/bwd
# halves of a previous bidirectional layer; the halves are never concatenated).
def _proj_kernel(*refs):
    *h_refs, w_ref, b_ref, o_ref = refs
    acc = jnp.dot(h_refs[0][...], w_ref[0], preferred_element_type=jnp.float32)
    for k in range(1, len(h_refs)):
        acc += jnp.dot(h_refs[k][...], w_ref[k], preferred_element_type=jnp.float32)
    o_ref[...] = (acc + b_ref[...]).astype(o_ref.dtype)


def gate_projection(hs, w, b, *, vmem_budget=24 * 1024 * 1024):
    """hs: tuple of K arrays (N, Hin); w: (n_out, K, Hin, G); b: (n_out, 1, G).

    Returns (n_out, N, G).  Grid is (row, head) with head innermost so the
    activation row-tile is fetched once and reused for every head.
    """
    K = len(hs)
    N, Hin = hs[0].shape
    n_out, K2, Hin2, G = w.shape
    assert K2 == K and Hin2 == Hin

    def footprint(tn):
        # double-buffered activation + output tiles, weights + bias buffers
        return (2 * K * tn * Hin + 2 * tn * G + 2 * (K * Hin * G + G)) * 4

    TN = _row_tile(N)
    while TN > 8 and footprint(TN) > vmem_budget:
        TN = _row_tile(N, TN // 2)
    vmem_limit = int(min(60 << 20, max(32 << 20, 2 * footprint(TN))))

    in_specs = [pl.BlockSpec((TN, Hin), lambda r, d: (r, 0)) for _ in range(K)]
    in_specs += [
        pl.BlockSpec((None, K, Hin, G), lambda r, d: (d, 0, 0, 0)),
        pl.BlockSpec((None, 1, G), lambda r, d: (d, 0, 0)),
    ]
    return pl.pallas_call(
        _proj_kernel,
        out_shape=jax.ShapeDtypeStruct((n_out, N, G), jnp.float32),
        grid_spec=pltpu.PrefetchScalarGridSpec(
            num_scalar_prefetch=0,
            grid=(N // TN, n_out),
            in_specs=in_specs,
            out_specs=pl.BlockSpec((None, TN, G), lambda r, d: (d, r, 0)),
        ),
        compiler_params=pltpu.CompilerParams(
            dimension_semantics=("parallel", "arbitrary"),
            vmem_limit_bytes=vmem_limit),
    )(*hs, w, b)


# ------------------ fused bidirectional LSTM chunk kernel --------------------
def _lstm_fused_kernel(gxf_ref, gxb_ref, whh_ref, of_ref, ob_ref,
                       hf_scr, cf_scr, hb_scr, cb_scr):
    tb = pl.program_id(0)

    @pl.when(tb == 0)
    def _():
        hf_scr[...] = jnp.zeros_like(hf_scr)
        cf_scr[...] = jnp.zeros_like(cf_scr)
        hb_scr[...] = jnp.zeros_like(hb_scr)
        cb_scr[...] = jnp.zeros_like(cb_scr)

    Tc = gxf_ref.shape[0]
    H = hf_scr.shape[1]                 # padded to a multiple of 128 lanes
    whh_f = whh_ref[0]                  # (H, 4H), resident across the chunk
    whh_b = whh_ref[1]

    def cell(gates, c_prev):
        ig = jax.nn.sigmoid(gates[:, 0 * H:1 * H])
        fg = jax.nn.sigmoid(gates[:, 1 * H:2 * H])
        gg = jnp.tanh(gates[:, 2 * H:3 * H])
        og = jax.nn.sigmoid(gates[:, 3 * H:4 * H])
        c = fg * c_prev + ig * gg
        h = og * jnp.tanh(c)
        return h, c

    # Fully unrolled, static indices: forward walks 0..Tc-1 of its chunk,
    # backward walks Tc-1..0 of the (index-map-reversed) backward chunk.
    # Two independent matmuls per step -> MXU latency of one direction hides
    # the EUP/VPU work of the other.
    for i in range(Tc):
        tf, tr = i, Tc - 1 - i
        gates_f = gxf_ref[tf] + jnp.dot(hf_scr[...], whh_f,
                                        preferred_element_type=jnp.float32)
        gates_b = gxb_ref[tr] + jnp.dot(hb_scr[...], whh_b,
                                        preferred_element_type=jnp.float32)
        hf, cf = cell(gates_f, cf_scr[...])
        hb, cb = cell(gates_b, cb_scr[...])
        hf_scr[...] = hf
        cf_scr[...] = cf
        hb_scr[...] = hb
        cb_scr[...] = cb
        of_ref[tf] = hf.astype(of_ref.dtype)
        ob_ref[tr] = hb.astype(ob_ref.dtype)


def lstm_recurrence(gx, w_hh, time_chunk):
    """gx: (2, T, B, 4H) precomputed input gates (direction-major),
    w_hh: (2, H, 4H).  Returns (h_fwd, h_bwd), each (T, B, H)."""
    _, T, B, G = gx.shape
    H = w_hh.shape[1]
    Tc = time_chunk
    assert T % Tc == 0
    n_tc = T // Tc

    foot = (2 * 2 * Tc * B * G + 2 * 2 * Tc * B * H + 2 * 2 * H * G
            + 4 * B * H) * 4
    vmem_limit = int(min(60 << 20, max(32 << 20, 2 * foot)))

    return pl.pallas_call(
        _lstm_fused_kernel,
        out_shape=(jax.ShapeDtypeStruct((T, B, H), jnp.float32),
                   jax.ShapeDtypeStruct((T, B, H), jnp.float32)),
        grid_spec=pltpu.PrefetchScalarGridSpec(
            num_scalar_prefetch=0,
            grid=(n_tc,),
            in_specs=[
                # same gx array passed twice: forward chunks in order ...
                pl.BlockSpec((None, Tc, B, G), lambda tb: (0, tb, 0, 0)),
                # ... backward chunks in reverse order (time reversal purely
                # via the index_map; no array flips in HBM).
                pl.BlockSpec((None, Tc, B, G),
                             lambda tb: (1, n_tc - 1 - tb, 0, 0)),
                pl.BlockSpec((2, H, G), lambda tb: (0, 0, 0)),
            ],
            out_specs=[
                pl.BlockSpec((Tc, B, H), lambda tb: (tb, 0, 0)),
                pl.BlockSpec((Tc, B, H), lambda tb: (n_tc - 1 - tb, 0, 0)),
            ],
            scratch_shapes=[pltpu.VMEM((B, H), jnp.float32)] * 4,  # h/c fwd+bwd
        ),
        compiler_params=pltpu.CompilerParams(
            # NOTE: the single grid axis carries h/c state in VMEM scratch, so
            # it MUST remain one serial ("arbitrary") axis.  Do not mark it
            # parallel or add axes outside it.
            dimension_semantics=("arbitrary",),
            vmem_limit_bytes=vmem_limit),
    )(gx, gx, w_hh)


# ------------------------------ full forward ---------------------------------
def rnn_forward(xb, params):
    """xb: (B, T, F) -> (T, B, output_size), matching the PyTorch module."""
    B, T, F = xb.shape
    B_pad = max(8, _round_up(B, 8))            # sublane-pad the batch
    H_pad = params["hidden_pad"]
    Tc = min(16, T)                            # fully-unrolled chunk length
    T_pad = _round_up(T, Tc)                   # pad T instead of degrading Tc

    x = jnp.transpose(xb, (1, 0, 2)).astype(jnp.float32)   # (T, B, F) time-major
    if B_pad != B:
        x = jnp.pad(x, ((0, 0), (0, B_pad - B), (0, 0)))

    hs = (x.reshape(T * B_pad, F),)            # K = 1 input chunk
    cur_T = T
    for (w_ih, w_hh, bias) in params["lstm"]:
        G = w_ih.shape[3]
        # (1) hoisted input projection for all timesteps & both directions
        gx = gate_projection(hs, w_ih, bias)                 # (2, N, 4H)
        gx = gx.reshape(2, cur_T, B_pad, G)                  # free reshape
        if T_pad != T:
            if cur_T < T_pad:
                # zero gates keep the backward state exactly 0 through the pad
                gx = jnp.pad(gx, ((0, 0), (0, T_pad - cur_T), (0, 0), (0, 0)))
            else:
                tmask = (jnp.arange(T_pad) < T)[None, :, None, None]
                gx = jnp.where(tmask, gx, jnp.zeros_like(gx))
        # (2) fused fwd+bwd serial recurrence, time-chunked & fully unrolled
        h_f, h_b = lstm_recurrence(gx, w_hh, Tc)             # 2 x (T_pad,B,H)
        cur_T = T_pad
        N2 = cur_T * B_pad
        hs = (h_f.reshape(N2, H_pad), h_b.reshape(N2, H_pad))

    # 1x1 conv head == dense over the 2H channel dim (fwd/bwd halves summed
    # inside the projection kernel; lane-dense padded output channels)
    wc, bc = params["conv"]
    out = gate_projection(hs, wc, bc)[0]                     # (N2, O_pad)
    O = params["output_size"]
    out = out.reshape(cur_T, B_pad, -1)[:T, :B, :O]          # (T, B, O)
    return out


# ------------------------- parameter construction ---------------------------
def init_params(key, feature_size, hidden_size, output_size, num_layers):
    H = hidden_size
    H_pad = _round_up(max(H, 128), 128)        # lane-dense hidden dim
    G = 4 * H
    k = 1.0 / (H ** 0.5)

    def pad_gate_cols(a):
        # (..., 4H) -> (..., 4H_pad): pad each gate block to H_pad lanes.
        parts = jnp.split(a, 4, axis=-1)
        widths = [(0, 0)] * (a.ndim - 1) + [(0, H_pad - H)]
        return jnp.concatenate([jnp.pad(p, widths) for p in parts], axis=-1)

    lstm_kernel, lstm_ref = [], []
    for l in range(num_layers):
        K, Hin = (1, feature_size) if l == 0 else (2, H)
        key, k1, k2, k3, k4 = jax.random.split(key, 5)
        # W_ih packed as (direction, input-chunk, Hin, 4H) (== W_ih.T by chunk)
        w_ih = jax.random.uniform(k1, (2, K, Hin, G), jnp.float32, -k, k)
        w_hh = jax.random.uniform(k2, (2, H, G), jnp.float32, -k, k)
        b_ih = jax.random.uniform(k3, (2, 1, G), jnp.float32, -k, k)
        b_hh = jax.random.uniform(k4, (2, 1, G), jnp.float32, -k, k)
        bias = b_ih + b_hh
        lstm_ref.append((w_ih, w_hh, bias))

        # lane-padded kernel weights (padded rows/cols are exactly zero, so the
        # padded hidden channels stay identically 0 through the recurrence)
        w_ih_p = pad_gate_cols(w_ih)
        if l > 0 and H_pad != H:
            w_ih_p = jnp.pad(w_ih_p, ((0, 0), (0, 0), (0, H_pad - H), (0, 0)))
        w_hh_p = jnp.pad(pad_gate_cols(w_hh), ((0, 0), (0, H_pad - H), (0, 0)))
        bias_p = pad_gate_cols(bias)
        lstm_kernel.append((w_ih_p, w_hh_p, bias_p))

    key, kc1, kc2 = jax.random.split(key, 3)
    kc = 1.0 / ((2 * H) ** 0.5)
    O_pad = _round_up(max(output_size, 128), 128)            # lane-dense head
    wc = jax.random.uniform(kc1, (2, H, output_size), jnp.float32, -kc, kc)
    bc = jax.random.uniform(kc2, (output_size,), jnp.float32, -kc, kc)
    wc_p = jnp.zeros((1, 2, H_pad, O_pad), jnp.float32)
    wc_p = wc_p.at[0, :, :H, :output_size].set(wc)
    bc_p = jnp.zeros((1, 1, O_pad), jnp.float32).at[0, 0, :output_size].set(bc)

    return {
        "lstm": lstm_kernel, "conv": (wc_p, bc_p),
        "lstm_ref": lstm_ref, "conv_ref": (wc, bc),
        "output_size": output_size, "hidden_size": H, "hidden_pad": H_pad,
    }


# ------------------------------ pure-JAX ref ---------------------------------
def _lstm_ref_dir(x, w_ih_full, w_hh, b):
    T, B, _ = x.shape
    H = w_hh.shape[0]

    def step(carry, x_t):
        h, c = carry
        g = x_t @ w_ih_full + h @ w_hh + b
        i = jax.nn.sigmoid(g[:, :H])
        f = jax.nn.sigmoid(g[:, H:2 * H])
        gg = jnp.tanh(g[:, 2 * H:3 * H])
        o = jax.nn.sigmoid(g[:, 3 * H:])
        c = f * c + i * gg
        h = o * jnp.tanh(c)
        return (h, c), h

    (_, _), hs = jax.lax.scan(step, (jnp.zeros((B, H)), jnp.zeros((B, H))), x)
    return hs


def rnn_ref(xb, params):
    x = jnp.transpose(xb, (1, 0, 2)).astype(jnp.float32)
    for (w_ih, w_hh, b) in params["lstm_ref"]:
        g = w_ih.shape[-1]
        w_f = w_ih[0].reshape(-1, g)
        w_b = w_ih[1].reshape(-1, g)
        fwd = _lstm_ref_dir(x, w_f, w_hh[0], b[0])
        bwd = _lstm_ref_dir(x[::-1], w_b, w_hh[1], b[1])[::-1]
        x = jnp.concatenate([fwd, bwd], axis=-1)
    wc, bc = params["conv_ref"]
    w_full = jnp.concatenate([wc[0], wc[1]], axis=0)          # (2H, O)
    return x @ w_full + bc                                    # (T, B, O)


if __name__ == "__main__":
    B, T = 2, 8
    feature_size, hidden_size, output_size, num_layers = 8, 32, 8, 2

    key = jax.random.PRNGKey(0)
    key, kx = jax.random.split(key)
    xb = jax.random.normal(kx, (B, T, feature_size), jnp.float32)

    params = init_params(key, feature_size, hidden_size, output_size, num_layers)

    out = jax.block_until_ready(rnn_forward(xb, params))
    assert out.shape == (T, B, output_size), out.shape

    ref = jax.block_until_ready(rnn_ref(xb, params))
    err = float(jnp.max(jnp.abs(out - ref)))
    assert jnp.allclose(out, ref, rtol=1e-4, atol=1e-4), err

    print("KERNEL_OK")
</pallas_src>

<mosaic_0001>
module attributes {stable_mosaic.version = 11 : i64} {
  func.func @_proj_kernel(%arg0: i32, %arg1: i32, %arg2: memref<64x8xf32, #tpu.memory_space<vmem>>, %arg3: memref<1x1x8x512xf32, #tpu.memory_space<vmem>>, %arg4: memref<1x1x512xf32, #tpu.memory_space<vmem>>, %arg5: memref<1x64x512xf32, #tpu.memory_space<vmem>>) attributes {dimension_semantics = [#tpu.dimension_semantics<parallel>, #tpu.dimension_semantics<arbitrary>], iteration_bounds = array<i64: 1, 2>, scalar_prefetch = 0 : i64, scratch_operands = 0 : i64, tpu.core_type = #tpu.core_type<tc>, window_params = [{transform_indices = @transform_0, window_bounds = array<i64: 64, 8>}, {transform_indices = @transform_1, window_bounds = array<i64: 1, 1, 8, 512>}, {transform_indices = @transform_2, window_bounds = array<i64: 1, 1, 512>}, {transform_indices = @transform_3, window_bounds = array<i64: 1, 64, 512>}]} {
    %c0 = arith.constant 0 : index
    %c0_0 = arith.constant 0 : index
    %0 = vector.load %arg2[%c0, %c0_0] : memref<64x8xf32, #tpu.memory_space<vmem>>, vector<64x8xf32>
    %c0_1 = arith.constant 0 : index
    %c0_2 = arith.constant 0 : index
    %c0_3 = arith.constant 0 : index
    %c0_4 = arith.constant 0 : index
    %1 = vector.load %arg3[%c0_1, %c0_2, %c0_3, %c0_4] : memref<1x1x8x512xf32, #tpu.memory_space<vmem>>, vector<1x1x8x512xf32>
    %2 = vector.shape_cast %1 : vector<1x1x8x512xf32> to vector<8x512xf32>
    %cst = arith.constant dense<0.000000e+00> : vector<64x512xf32>
    %3 = tpu.matmul %0, %2, %cst {dimension_numbers = #tpu.dot_dimension_numbers<[1], [0], [0], [1], [0, 0, 1, 1], [], []>} : vector<64x8xf32>, vector<8x512xf32>, vector<64x512xf32> -> vector<64x512xf32>
    %c0_5 = arith.constant 0 : index
    %c0_6 = arith.constant 0 : index
    %c0_7 = arith.constant 0 : index
    %4 = vector.load %arg4[%c0_5, %c0_6, %c0_7] : memref<1x1x512xf32, #tpu.memory_space<vmem>>, vector<1x1x512xf32>
    %5 = vector.shape_cast %4 : vector<1x1x512xf32> to vector<1x512xf32>
    %6 = vector.broadcast %5 : vector<1x512xf32> to vector<64x512xf32>
    %7 = arith.addf %3, %6 : vector<64x512xf32>
    %c0_8 = arith.constant 0 : index
    %c0_9 = arith.constant 0 : index
    %c0_10 = arith.constant 0 : index
    %8 = vector.load %arg5[%c0_8, %c0_9, %c0_10] : memref<1x64x512xf32, #tpu.memory_space<vmem>>, vector<1x64x512xf32>
    %9 = vector.shape_cast %8 : vector<1x64x512xf32> to vector<64x512xf32>
    %10 = vector.shape_cast %7 : vector<64x512xf32> to vector<1x64x512xf32>
    tpu.vector_store %arg5[%c0_8, %c0_9, %c0_10], %10 {strides = array<i32>} : memref<1x64x512xf32, #tpu.memory_space<vmem>>, vector<1x64x512xf32>,
    return
  }
  func.func @transform_0(%arg0: i32, %arg1: i32) -> (i32, i32) {
    %c0_i32 = arith.constant 0 : i32
    %c0_i32_0 = arith.constant 0 : i32
    return %arg0, %c0_i32 : i32, i32
  }
  func.func @transform_1(%arg0: i32, %arg1: i32) -> (i32, i32, i32, i32) {
    %c0_i32 = arith.constant 0 : i32
    %c0_i32_0 = arith.constant 0 : i32
    %c0_i32_1 = arith.constant 0 : i32
    %c0_i32_2 = arith.constant 0 : i32
    return %arg1, %c0_i32, %c0_i32_0, %c0_i32_1 : i32, i32, i32, i32
  }
  func.func @transform_2(%arg0: i32, %arg1: i32) -> (i32, i32, i32) {
    %c0_i32 = arith.constant 0 : i32
    %c0_i32_0 = arith.constant 0 : i32
    %c0_i32_1 = arith.constant 0 : i32
    return %arg1, %c0_i32, %c0_i32_0 : i32, i32, i32
  }
  func.func @transform_3(%arg0: i32, %arg1: i32) -> (i32, i32, i32) {
    %c0_i32 = arith.constant 0 : i32
    %c0_i32_0 = arith.constant 0 : i32
    return %arg1, %arg0, %c0_i32 : i32, i32, i32
  }
}

</mosaic_0001>

<llo_original>
// kernel: tpu_custom_call.1
$region0: #{tpu_custom_call.1}
  #allocation0 [shape = 'u32[]', space=smem, size = 0x4, offset = 0x4, fixed_abs, tag = 'smem constant byte address 0x4 - core index']
  #allocation1 [shape = 'u32[72,128]{1,0:T(1,128)}', space=vmem, size = 0x9000, scoped, tag = 'internal scratch']
  %s0 = inlined_call_operand.vmem [shape: f32[64,8], index: 0, kind: input, shape index: {}]
  %s1 = inlined_call_operand.vmem [shape: f32[2,1,8,512], index: 1, kind: input, shape index: {}]
  %s2 = inlined_call_operand.vmem [shape: f32[2,1,512], index: 2, kind: input, shape index: {}]
  %s3 = inlined_call_operand.hbm [shape: f32[2,64,512], index: 3, kind: output, shape index: {}]
  %s4 = sld [smem:[#allocation0]]
  $region45: #{tpu_custom_call.1} parent=0
    _
  %s6 = ssub.s32 1, %s4
  %s7 = scalar_select 0, %s6, %s4
  $region1: #{tpu_custom_call.1} parent=0
    #allocation2 [shape = 'u8[262144]{0}', space=vmem, size = 0x40000, scoped, tag = 'output window, operand 0']
    #allocation3 [shape = 's32[2]{0}', space=sflag, size = 0x8, scoped, tag = 'scoped memory for tpu_custom_call.1']
    %8 = vsyncpa [#allocation3], 0
    %s9 = scalar_lea.sflag [#allocation3], 1
    %10 = vsyncpa %s9, 0
    loop: start=0, step=1, limit=4
    $region2: #{tpu_custom_call.1} parent=1 // loop_pre_header
      _
    $region3: #{tpu_custom_call.1} parent=1 // loop_header
      %s12 = sphi 0, %s16
      %p13 = scmp.ge.s32.totalorder %s12, 4
      %s19 = sphi 0, %s31
      %s20 = sphi 0, %s27
      %s21 = sphi 0, %s19
      %s22 = sphi 0, %s20
      %s23 = sphi 0, %s21
      %s24 = sphi 0, %s22
      %s34 = sphi 0, %s36
      %s37 = sphi 0, %s34
      %s38 = sphi 0, %s37
      %s54 = sphi 0, %s38
      %s60 = sphi 0, %s62
      %s63 = sphi 0, %s60
      %s64 = sphi 0, %s63
      %s80 = sphi 0, %s64
      %s86 = sphi 0, %s88
      %s89 = sphi 0, %s86
      %s90 = sphi 0, %s89
      %s106 = sphi 0, %s90
      %s114 = sphi 0, %s116
      %s117 = sphi 0, %s114
      %s118 = sphi 0, %s117
      %s134 = sphi 0, %s118
    $region4: #{tpu_custom_call.1} parent=1 // loop_header_branch
      %15 = sbr.rel (%p13) target = $region8
    $region5: #{tpu_custom_call.1} parent=1 // loop_body
      %s17 = ssub.s32 %s12, 1
      %s18 = ssub.s32 %s12, 2
      %s25 = sadd.s32 1, %s20
      %p26 = scmp.ge.s32.totalorder %s25, 2
      %s27 = scalar_select %p26, 0, %s25
      %s28 = sadd.s32 1, %s19
      %s29 = scalar_select %p26, %s28, %s19
      %p30 = scmp.ge.s32.totalorder %s29, 1
      %s31 = scalar_select %p30, 0, %s29
      %s32 = ssub.s32 %s19, %s31
      %p33 = scmp.eq.s32.totalorder %s32, 0
      %s35 = sadd.s32 %s34, 1
      %s36 = scalar_select %p33, %s34, %s35
      %p39 = pneg %p33
      %p40 = scmp.eq.s32.totalorder %s12, 1
      %p41 = por %p39, %p40
      %p42 = scmp.ne.s32.totalorder %s34, %s37
      %p43 = scmp.eq.s32.totalorder %s12, 0
      %p44 = por %p42, %p43
      %p45 = scmp.ne.s32.totalorder %s34, %s37
      %p46 = scmp.eq.s32.totalorder %s17, 1
      %p47 = por %p45, %p46
      %p48 = scmp.ne.s32.totalorder %s37, %s38
      %p49 = scmp.eq.s32.totalorder %s17, 0
      %p50 = por %p48, %p49
      %p51 = scmp.ne.s32.totalorder %s37, %s38
      %p52 = scmp.eq.s32.totalorder %s18, 1
      %p53 = por %p51, %p52
      %p55 = scmp.ne.s32.totalorder %s38, %s54
      %p56 = scmp.eq.s32.totalorder %s18, 0
      %p57 = por %p55, %p56
      %s58 = ssub.s32 %s20, %s27
      %p59 = scmp.eq.s32.totalorder %s58, 0
      %s61 = sadd.s32 %s60, 1
      %s62 = scalar_select %p59, %s60, %s61
      %p65 = pneg %p59
      %p66 = scmp.eq.s32.totalorder %s12, 1
      %p67 = por %p65, %p66
      %p68 = scmp.ne.s32.totalorder %s60, %s63
      %p69 = scmp.eq.s32.totalorder %s12, 0
      %p70 = por %p68, %p69
      %p71 = scmp.ne.s32.totalorder %s60, %s63
      %p72 = scmp.eq.s32.totalorder %s17, 1
      %p73 = por %p71, %p72
      %p74 = scmp.ne.s32.totalorder %s63, %s64
      %p75 = scmp.eq.s32.totalorder %s17, 0
      %p76 = por %p74, %p75
      %p77 = scmp.ne.s32.totalorder %s63, %s64
      %p78 = scmp.eq.s32.totalorder %s18, 1
      %p79 = por %p77, %p78
      %p81 = scmp.ne.s32.totalorder %s64, %s80
      %p82 = scmp.eq.s32.totalorder %s18, 0
      %p83 = por %p81, %p82
      %s84 = ssub.s32 %s20, %s27
      %p85 = scmp.eq.s32.totalorder %s84, 0
      %s87 = sadd.s32 %s86, 1
      %s88 = scalar_select %p85, %s86, %s87
      %p91 = pneg %p85
      %p92 = scmp.eq.s32.totalorder %s12, 1
      %p93 = por %p91, %p92
      %p94 = scmp.ne.s32.totalorder %s86, %s89
      %p95 = scmp.eq.s32.totalorder %s12, 0
      %p96 = por %p94, %p95
      %p97 = scmp.ne.s32.totalorder %s86, %s89
      %p98 = scmp.eq.s32.totalorder %s17, 1
      %p99 = por %p97, %p98
      %p100 = scmp.ne.s32.totalorder %s89, %s90
      %p101 = scmp.eq.s32.totalorder %s17, 0
      %p102 = por %p100, %p101
      %p103 = scmp.ne.s32.totalorder %s89, %s90
      %p104 = scmp.eq.s32.totalorder %s18, 1
      %p105 = por %p103, %p104
      %p107 = scmp.ne.s32.totalorder %s90, %s106
      %p108 = scmp.eq.s32.totalorder %s18, 0
      %p109 = por %p107, %p108
      %s110 = ssub.s32 %s20, %s27
      %s111 = ssub.s32 %s19, %s31
      %s112 = sor.u32 %s110, %s111
      %p113 = scmp.eq.s32.totalorder %s112, 0
      %s115 = sadd.s32 %s114, 1
      %s116 = scalar_select %p113, %s114, %s115
      %p119 = pneg %p113
      %p120 = scmp.eq.s32.totalorder %s12, 1
      %p121 = por %p119, %p120
      %p122 = scmp.ne.s32.totalorder %s114, %s117
      %p123 = scmp.eq.s32.totalorder %s12, 0
      %p124 = por %p122, %p123
      %p125 = scmp.ne.s32.totalorder %s114, %s117
      %p126 = scmp.eq.s32.totalorder %s17, 1
      %p127 = por %p125, %p126
      %p128 = scmp.ne.s32.totalorder %s117, %s118
      %p129 = scmp.eq.s32.totalorder %s17, 0
      %p130 = por %p128, %p129
      %p131 = scmp.ne.s32.totalorder %s117, %s118
      %p132 = scmp.eq.s32.totalorder %s18, 1
      %p133 = por %p131, %p132
      %p135 = scmp.ne.s32.totalorder %s118, %s134
      %p136 = scmp.eq.s32.totalorder %s18, 0
      %p137 = por %p135, %p136
      %p138 = scmp.le.s32.totalorder 1, %s12
      %p139 = scmp.lt.s32.totalorder %s12, 3
      %p140 = pnand %p138, %p139
      %p141 = pneg %p140
      // Predicated region
      $region9: #{tpu_custom_call.1} parent=5 // pred_check
        _
      $region10: #{tpu_custom_call.1} parent=5 // pred_check_branch
        %143 = sbr.rel (%p140) target = $region12
      $region11: #{tpu_custom_call.1} parent=5 // pred_region
        %s144 = ssub.s32 %s12, 1
        // Predicated region
        $region13: #{tpu_custom_call.1} parent=11 // pred_check
          %p145 = pneg %p50
        $region14: #{tpu_custom_call.1} parent=11 // pred_check_branch
          %147 = sbr.rel (%p145) target = $region16
        $region15: #{tpu_custom_call.1} parent=11 // pred_region
          %s148 = smul.u32 8, %s21
          %p149 = scmp.lt.s32.totalorder %s148, 7
          %s150 = scalar_select %p149, %s148, 7
          %s151 = smul.addr %s150, 8
          %s152 = scalar_lea.vmem %s0, %s151
          %s153 = smul.u32 8, %s21
        $region16: #{tpu_custom_call.1} parent=11 // pred_fallthru
          _
      $region12: #{tpu_custom_call.1} parent=5 // pred_fallthru
        _
      %p154 = scmp.lt.s32.totalorder %s12, 2
      // Predicated region
      $region17: #{tpu_custom_call.1} parent=5 // pred_check
        %p155 = pneg %p154
      $region18: #{tpu_custom_call.1} parent=5 // pred_check_branch
        %157 = sbr.rel (%p155) target = $region20
      $region19: #{tpu_custom_call.1} parent=5 // pred_region
        // Predicated region
        $region21: #{tpu_custom_call.1} parent=19 // pred_check
          %p158 = pneg %p70
        $region22: #{tpu_custom_call.1} parent=19 // pred_check_branch
          %160 = sbr.rel (%p158) target = $region24
        $region23: #{tpu_custom_call.1} parent=19 // pred_region
          %p161 = scmp.lt.s32.totalorder %s20, 1
          %s162 = scalar_select %p161, %s20, 1
          %s163 = smul.addr %s162, 4
          %s164 = smul.addr %s163, 8
          %s165 = scalar_lea.vmem %s1, %s164
        $region24: #{tpu_custom_call.1} parent=19 // pred_fallthru
          _
        // Predicated region
        $region25: #{tpu_custom_call.1} parent=19 // pred_check
          %p166 = pneg %p96
        $region26: #{tpu_custom_call.1} parent=19 // pred_check_branch
          %168 = sbr.rel (%p166) target = $region28
        $region27: #{tpu_custom_call.1} parent=19 // pred_region
          %p169 = scmp.lt.s32.totalorder %s20, 1
          %s170 = scalar_select %p169, %s20, 1
          %s171 = smul.addr %s170, 4
          %s172 = scalar_lea.vmem %s2, %s171
        $region28: #{tpu_custom_call.1} parent=19 // pred_fallthru
          _
      $region20: #{tpu_custom_call.1} parent=5 // pred_fallthru
        _
      %p173 = scmp.le.s32.totalorder 1, %s12
      %p174 = scmp.lt.s32.totalorder %s12, 3
      %p175 = pnand %p173, %p174
      %p176 = pneg %p175
      // Predicated region
      $region29: #{tpu_custom_call.1} parent=5 // pred_check
        _
      $region30: #{tpu_custom_call.1} parent=5 // pred_check_branch
        %178 = sbr.rel (%p175) target = $region32
      $region31: #{tpu_custom_call.1} parent=5 // pred_region
        %s179 = ssub.s32 %s12, 1
        %s180 = smul.u32 8, %s21
        %p181 = scmp.lt.s32.totalorder %s180, 7
        %s182 = scalar_select %p181, %s180, 7
        %s183 = smul.addr %s182, 8
        %s184 = scalar_lea.vmem %s0, %s183
        %p185 = pneg %p50
        %p186 = pneg %p47
        %p187 = scmp.lt.s32.totalorder %s22, 1
        %s188 = scalar_select %p187, %s22, 1
        %s189 = smul.addr %s188, 4
        %s190 = smul.addr %s189, 8
        %s191 = scalar_lea.vmem %s1, %s190
        %p192 = pneg %p76
        %p193 = pneg %p73
        %p194 = scmp.lt.s32.totalorder %s22, 1
        %s195 = scalar_select %p194, %s22, 1
        %s196 = smul.addr %s195, 4
        %s197 = scalar_lea.vmem %s2, %s196
        %p198 = pneg %p102
        %p199 = pneg %p99
        %p200 = pneg %p130
        %p201 = pneg %p127
        %s202 = sand.u32 %s117, 1
        %s203 = scalar_lea.sflag [#allocation3], %s202
        %s204 = sand.u32 %s117, 1
        %s205 = smul.addr %s204, 256
        %s206 = scalar_lea.vmem [#allocation2], %s205
        %s207 = smul.u32 8, %s21
        %p208 = scmp.lt.s32.totalorder %s207, 7
        %s209 = scalar_select %p208, %s207, 7
        %s210 = smul.addr %s209, 8
        %s211 = scalar_lea.vmem %s0, %s210
        %s212 = smul.u32 8, %s21
        %p213 = scmp.lt.s32.totalorder %s22, 1
        %s214 = scalar_select %p213, %s22, 1
        %s215 = smul.addr %s214, 4
        %s216 = smul.addr %s215, 8
        %s217 = scalar_lea.vmem %s1, %s216
        %p218 = scmp.lt.s32.totalorder %s22, 1
        %s219 = scalar_select %p218, %s22, 1
        %s220 = smul.addr %s219, 4
        %s221 = scalar_lea.vmem %s2, %s220
        %s222 = smul.u32 8, %s21
        %v223 = vld [vmem:[%s211] sm:$0xff]
        %v224 = vld [vmem:[%s211 + $0x8] sm:$0xff]
        %v225 = vld [vmem:[%s211 + $0x10] sm:$0xff]
        %v226 = vld [vmem:[%s211 + $0x18] sm:$0xff]
        %v227 = vld [vmem:[%s211 + $0x20] sm:$0xff]
        %v228 = vld [vmem:[%s211 + $0x28] sm:$0xff]
        %v229 = vld [vmem:[%s211 + $0x30] sm:$0xff]
        %v230 = vld [vmem:[%s211 + $0x38] sm:$0xff]
        %v231 = vld [vmem:[%s217] sm:$0xff]
        %v232 = vld [vmem:[%s217 + $0x8] sm:$0xff]
        %v233 = vld [vmem:[%s217 + $0x10] sm:$0xff]
        %v234 = vld [vmem:[%s217 + $0x18] sm:$0xff]
        %v235 = vld [vmem:[%s221] sm:$0xf]
        %v237 = vperm.slane %v235, 0
        %v238 = vperm.slane %v235, 1
        %v239 = vperm.slane %v235, 2
        %v240 = vperm.slane %v235, 3
        %vm245 = vcmask 64512
        %v247 = vsel %vm245, %v223, 0
        %v250 = vsel %vm245, %v224, 0
        %v253 = vsel %vm245, %v225, 0
        %v256 = vsel %vm245, %v226, 0
        %v259 = vsel %vm245, %v227, 0
        %v262 = vsel %vm245, %v228, 0
        %v265 = vsel %vm245, %v229, 0
        %v268 = vsel %vm245, %v230, 0
        %270 = vmatpush.msra.mxu0 0.0
        %271 = vmatpush.msra.mxu0 0.0
        %272 = vmatpush.msra.mxu0 0.0
        %273 = vmatpush.msra.mxu0 0.0
        %274 = vmatpush.msra.mxu0 0.0
        %275 = vmatpush.msra.mxu0 0.0
        %276 = vmatpush.msra.mxu0 0.0
        %277 = vmatpush.msra.mxu0 0.0
        %278 = vmatpush.msra.mxu0 0.0
        %279 = vmatpush.msra.mxu0 0.0
        %280 = vmatpush.msra.mxu0 0.0
        %281 = vmatpush.msra.mxu0 0.0
        %282 = vmatpush.msra.mxu0 0.0
        %283 = vmatpush.msra.mxu0 0.0
        %284 = vmatpush.msra.mxu0 0.0
        %285 = vmatpush.msra.mxu0 %v231
        %286 = vmatmul.f32.gmra.mxu0 %v247
        %v287 = vpop.f32.mrf.mxu0
        %v288 = vadd.f32 %v237, %v287
        %289 = vmatmul.f32.gmra.mxu0 %v250
        %v290 = vpop.f32.mrf.mxu0
        %v291 = vadd.f32 %v237, %v290
        %292 = vmatmul.f32.gmra.mxu0 %v253
        %v293 = vpop.f32.mrf.mxu0
        %v294 = vadd.f32 %v237, %v293
        %295 = vmatmul.f32.gmra.mxu0 %v256
        %v296 = vpop.f32.mrf.mxu0
        %v297 = vadd.f32 %v237, %v296
        %298 = vmatmul.f32.gmra.mxu0 %v259
        %v299 = vpop.f32.mrf.mxu0
        %v300 = vadd.f32 %v237, %v299
        %301 = vmatmul.f32.gmra.mxu0 %v262
        %v302 = vpop.f32.mrf.mxu0
        %v303 = vadd.f32 %v237, %v302
        %304 = vmatmul.f32.gmra.mxu0 %v265
        %v305 = vpop.f32.mrf.mxu0
        %v306 = vadd.f32 %v237, %v305
        %307 = vmatmul.f32.gmra.mxu0 %v268
        %v308 = vpop.f32.mrf.mxu0
        %v309 = vadd.f32 %v237, %v308
        %310 = vdwg.mxu0
        %311 = vmatpush.msra.mxu0 0.0
        %312 = vmatpush.msra.mxu0 0.0
        %313 = vmatpush.msra.mxu0 0.0
        %314 = vmatpush.msra.mxu0 0.0
        %315 = vmatpush.msra.mxu0 0.0
        %316 = vmatpush.msra.mxu0 0.0
        %317 = vmatpush.msra.mxu0 0.0
        %318 = vmatpush.msra.mxu0 0.0
        %319 = vmatpush.msra.mxu0 0.0
        %320 = vmatpush.msra.mxu0 0.0
        %321 = vmatpush.msra.mxu0 0.0
        %322 = vmatpush.msra.mxu0 0.0
        %323 = vmatpush.msra.mxu0 0.0
        %324 = vmatpush.msra.mxu0 0.0
        %325 = vmatpush.msra.mxu0 0.0
        %326 = vmatpush.msra.mxu0 %v232
        %327 = vmatmul.f32.gmra.mxu0 %v247
        %v328 = vpop.f32.mrf.mxu0
        %v329 = vadd.f32 %v238, %v328
        %330 = vmatmul.f32.gmra.mxu0 %v250
        %v331 = vpop.f32.mrf.mxu0
        %v332 = vadd.f32 %v238, %v331
        %333 = vmatmul.f32.gmra.mxu0 %v253
        %v334 = vpop.f32.mrf.mxu0
        %v335 = vadd.f32 %v238, %v334
        %336 = vmatmul.f32.gmra.mxu0 %v256
        %v337 = vpop.f32.mrf.mxu0
        %v338 = vadd.f32 %v238, %v337
        %339 = vmatmul.f32.gmra.mxu0 %v259
        %v340 = vpop.f32.mrf.mxu0
        %v341 = vadd.f32 %v238, %v340
        %342 = vmatmul.f32.gmra.mxu0 %v262
        %v343 = vpop.f32.mrf.mxu0
        %v344 = vadd.f32 %v238, %v343
        %345 = vmatmul.f32.gmra.mxu0 %v265
        %v346 = vpop.f32.mrf.mxu0
        %v347 = vadd.f32 %v238, %v346
        %348 = vmatmul.f32.gmra.mxu0 %v268
        %v349 = vpop.f32.mrf.mxu0
        %v350 = vadd.f32 %v238, %v349
        %351 = vdwg.mxu0
        %352 = vmatpush.msra.mxu0 0.0
        %353 = vmatpush.msra.mxu0 0.0
        %354 = vmatpush.msra.mxu0 0.0
        %355 = vmatpush.msra.mxu0 0.0
        %356 = vmatpush.msra.mxu0 0.0
        %357 = vmatpush.msra.mxu0 0.0
        %358 = vmatpush.msra.mxu0 0.0
        %359 = vmatpush.msra.mxu0 0.0
        %360 = vmatpush.msra.mxu0 0.0
        %361 = vmatpush.msra.mxu0 0.0
        %362 = vmatpush.msra.mxu0 0.0
        %363 = vmatpush.msra.mxu0 0.0
        %364 = vmatpush.msra.mxu0 0.0
        %365 = vmatpush.msra.mxu0 0.0
        %366 = vmatpush.msra.mxu0 0.0
        %367 = vmatpush.msra.mxu0 %v233
        %368 = vmatmul.f32.gmra.mxu0 %v247
        %v369 = vpop.f32.mrf.mxu0
        %v370 = vadd.f32 %v239, %v369
        %371 = vmatmul.f32.gmra.mxu0 %v250
        %v372 = vpop.f32.mrf.mxu0
        %v373 = vadd.f32 %v239, %v372
        %374 = vmatmul.f32.gmra.mxu0 %v253
        %v375 = vpop.f32.mrf.mxu0
        %v376 = vadd.f32 %v239, %v375
        %377 = vmatmul.f32.gmra.mxu0 %v256
        %v378 = vpop.f32.mrf.mxu0
        %v379 = vadd.f32 %v239, %v378
        %380 = vmatmul.f32.gmra.mxu0 %v259
        %v381 = vpop.f32.mrf.mxu0
        %v382 = vadd.f32 %v239, %v381
        %383 = vmatmul.f32.gmra.mxu0 %v262
        %v384 = vpop.f32.mrf.mxu0
        %v385 = vadd.f32 %v239, %v384
        %386 = vmatmul.f32.gmra.mxu0 %v265
        %v387 = vpop.f32.mrf.mxu0
        %v388 = vadd.f32 %v239, %v387
        %389 = vmatmul.f32.gmra.mxu0 %v268
        %v390 = vpop.f32.mrf.mxu0
        %v391 = vadd.f32 %v239, %v390
        %392 = vdwg.mxu0
        %393 = vmatpush.msra.mxu0 0.0
        %394 = vmatpush.msra.mxu0 0.0
        %395 = vmatpush.msra.mxu0 0.0
        %396 = vmatpush.msra.mxu0 0.0
        %397 = vmatpush.msra.mxu0 0.0
        %398 = vmatpush.msra.mxu0 0.0
        %399 = vmatpush.msra.mxu0 0.0
        %400 = vmatpush.msra.mxu0 0.0
        %401 = vmatpush.msra.mxu0 0.0
        %402 = vmatpush.msra.mxu0 0.0
        %403 = vmatpush.msra.mxu0 0.0
        %404 = vmatpush.msra.mxu0 0.0
        %405 = vmatpush.msra.mxu0 0.0
        %406 = vmatpush.msra.mxu0 0.0
        %407 = vmatpush.msra.mxu0 0.0
        %408 = vmatpush.msra.mxu0 %v234
        %409 = vmatmul.f32.gmra.mxu0 %v247
        %v410 = vpop.f32.mrf.mxu0
        %v411 = vadd.f32 %v240, %v410
        %412 = vmatmul.f32.gmra.mxu0 %v250
        %v413 = vpop.f32.mrf.mxu0
        %v414 = vadd.f32 %v240, %v413
        %415 = vmatmul.f32.gmra.mxu0 %v253
        %v416 = vpop.f32.mrf.mxu0
        %v417 = vadd.f32 %v240, %v416
        %418 = vmatmul.f32.gmra.mxu0 %v256
        %v419 = vpop.f32.mrf.mxu0
        %v420 = vadd.f32 %v240, %v419
        %421 = vmatmul.f32.gmra.mxu0 %v259
        %v422 = vpop.f32.mrf.mxu0
        %v423 = vadd.f32 %v240, %v422
        %424 = vmatmul.f32.gmra.mxu0 %v262
        %v425 = vpop.f32.mrf.mxu0
        %v426 = vadd.f32 %v240, %v425
        %427 = vmatmul.f32.gmra.mxu0 %v265
        %v428 = vpop.f32.mrf.mxu0
        %v429 = vadd.f32 %v240, %v428
        %430 = vmatmul.f32.gmra.mxu0 %v268
        %v431 = vpop.f32.mrf.mxu0
        %v432 = vadd.f32 %v240, %v431
        %433 = vdwg.mxu0
        %434 = vst [vmem:[%s206] sm:$0xff] %v288
        %435 = vst [vmem:[%s206 + $0x8] sm:$0xff] %v329
        %436 = vst [vmem:[%s206 + $0x10] sm:$0xff] %v370
        %437 = vst [vmem:[%s206 + $0x18] sm:$0xff] %v411
        %438 = vst [vmem:[%s206 + $0x20] sm:$0xff] %v291
        %439 = vst [vmem:[%s206 + $0x28] sm:$0xff] %v332
        %440 = vst [vmem:[%s206 + $0x30] sm:$0xff] %v373
        %441 = vst [vmem:[%s206 + $0x38] sm:$0xff] %v414
        %442 = vst [vmem:[%s206 + $0x40] sm:$0xff] %v294
        %443 = vst [vmem:[%s206 + $0x48] sm:$0xff] %v335
        %444 = vst [vmem:[%s206 + $0x50] sm:$0xff] %v376
        %445 = vst [vmem:[%s206 + $0x58] sm:$0xff] %v417
        %446 = vst [vmem:[%s206 + $0x60] sm:$0xff] %v297
        %447 = vst [vmem:[%s206 + $0x68] sm:$0xff] %v338
        %448 = vst [vmem:[%s206 + $0x70] sm:$0xff] %v379
        %449 = vst [vmem:[%s206 + $0x78] sm:$0xff] %v420
        %450 = vst [vmem:[%s206 + $0x80] sm:$0xff] %v300
        %451 = vst [vmem:[%s206 + $0x88] sm:$0xff] %v341
        %452 = vst [vmem:[%s206 + $0x90] sm:$0xff] %v382
        %453 = vst [vmem:[%s206 + $0x98] sm:$0xff] %v423
        %454 = vst [vmem:[%s206 + $0xa0] sm:$0xff] %v303
        %455 = vst [vmem:[%s206 + $0xa8] sm:$0xff] %v344
        %456 = vst [vmem:[%s206 + $0xb0] sm:$0xff] %v385
        %457 = vst [vmem:[%s206 + $0xb8] sm:$0xff] %v426
        %458 = vst [vmem:[%s206 + $0xc0] sm:$0xff] %v306
        %459 = vst [vmem:[%s206 + $0xc8] sm:$0xff] %v347
        %460 = vst [vmem:[%s206 + $0xd0] sm:$0xff] %v388
        %461 = vst [vmem:[%s206 + $0xd8] sm:$0xff] %v429
        %462 = vst [vmem:[%s206 + $0xe0] sm:$0xff] %v309
        %463 = vst [vmem:[%s206 + $0xe8] sm:$0xff] %v350
        %464 = vst [vmem:[%s206 + $0xf0] sm:$0xff] %v391
        %465 = vst [vmem:[%s206 + $0xf8] sm:$0xff] %v432
        %s466 = sand.u32 %s117, 1
        %s467 = scalar_lea.sflag [#allocation3], %s466
        %s468 = sand.u32 %s117, 1
        %s469 = smul.addr %s468, 256
        %s470 = scalar_lea.vmem [#allocation2], %s469
        // Predicated region
        $region33: #{tpu_custom_call.1} parent=31 // pred_check
          %p471 = pneg %p127
        $region34: #{tpu_custom_call.1} parent=31 // pred_check_branch
          %473 = sbr.rel (%p471) target = $region36
        $region35: #{tpu_custom_call.1} parent=31 // pred_region
          %s474 = smul.u32 8, %s21
          %476 = vsyncadd %s467, 0
          %s477 = smul.addr %s474, 4
          %s478 = smul.addr %s22, 32
          %s479 = sadd.s32 %s477, %s478
          %s480 = smul.addr %s479, 8
          %s481 = scalar_lea.hbm %s3, %s480
          %s482 = sshll.u32 %s470, 4
          %s483 = int_to_ptr.vmem [resolvable:$true] %s482
          %s484 = sshll.u32 %s481, 4
          %s485 = int_to_ptr.hbm [resolvable:$true] %s484
          %490 = dma.vmem_to_hbm [thread:$0]  %s483, 4096, %s485, %s467, 512, 512, 32
        $region36: #{tpu_custom_call.1} parent=31 // pred_fallthru
          _
      $region32: #{tpu_custom_call.1} parent=5 // pred_fallthru
        _
      %p491 = scmp.le.s32.totalorder 2, %s12
      // Predicated region
      $region37: #{tpu_custom_call.1} parent=5 // pred_check
        %p492 = pneg %p491
      $region38: #{tpu_custom_call.1} parent=5 // pred_check_branch
        %494 = sbr.rel (%p492) target = $region40
      $region39: #{tpu_custom_call.1} parent=5 // pred_region
        %s495 = ssub.s32 %s12, 2
        // Predicated region
        $region41: #{tpu_custom_call.1} parent=39 // pred_check
          %p496 = pneg %p133
        $region42: #{tpu_custom_call.1} parent=39 // pred_check_branch
          %498 = sbr.rel (%p496) target = $region44
        $region43: #{tpu_custom_call.1} parent=39 // pred_region
          %s499 = sand.u32 %s118, 1
          %s500 = scalar_lea.sflag [#allocation3], %s499
          %s501 = sand.u32 %s118, 1
          %s502 = smul.addr %s501, 256
          %s503 = scalar_lea.vmem [#allocation2], %s502
          %505 = dma.done %s500, 4096
        $region44: #{tpu_custom_call.1} parent=39 // pred_fallthru
          _
      $region40: #{tpu_custom_call.1} parent=5 // pred_fallthru
        _
    $region6: #{tpu_custom_call.1} parent=1 // loop_footer
      %s16 = sadd.s32 1, %s12
    $region7: #{tpu_custom_call.1} parent=1 // loop_footer_branch
      %11 = sbr.rel target = $region3
    $region8: #{tpu_custom_call.1} parent=1 // loop_exit
      _
    %506 = vsyncpa [#allocation3], 1
    %s507 = scalar_lea.sflag [#allocation3], 1
    %508 = vsyncpa %s507, 1

</llo_original>
